<compile_context>
chip_gen: v7x
topology: tpu7x:2x2x1
jax: 0.10.0
libtpu: 0.0.40
codegen_flags: <defaults>
</compile_context>

<pallas_src>
import functools

import jax
import jax.numpy as jnp
from jax.experimental import pallas as pl
from jax.experimental.pallas import tpu as pltpu


def _round_up(v: int, m: int) -> int:
    return (v + m - 1) // m * m


def _pad2(a, rows: int, cols: int):
    return jnp.pad(a, ((0, rows - a.shape[0]), (0, cols - a.shape[1])))


def _dropout_masks(key, n_masks: int, shape, p: float):
    """Pre-scaled keep masks: 0 with prob p, 1/(1-p) with prob 1-p (float32)."""
    keys = jax.random.split(key, n_masks)
    scale = jnp.float32(1.0 / (1.0 - p))
    return [jax.random.bernoulli(k, 1.0 - p, shape).astype(jnp.float32) * scale
            for k in keys]


def _make_mlp_kernel(n_hiddens: int, n_masks: int, compute_dtype):
    """Kernel closure for a fixed layer count / dropout configuration."""

    def kernel(*refs):
        # refs = (x_ref, mask_refs..., w_in, b_in, [w_h, b_h]*, w_out, b_out, out_ref)
        x_ref = refs[0]
        mask_refs = refs[1:1 + n_masks]
        param_refs = refs[1 + n_masks:-1]
        out_ref = refs[-1]

        def dense(h, w_ref, b_ref):
            # bf16 (or f32) MXU operands, f32 accumulation, f32 bias add.
            acc = jnp.dot(h.astype(compute_dtype),
                          w_ref[...].astype(compute_dtype),
                          preferred_element_type=jnp.float32)
            return acc + b_ref[...]

        h = x_ref[...]
        # input layer + n_hiddens hidden layers: Linear -> ReLU -> Dropout
        for layer in range(n_hiddens + 1):
            h = dense(h, param_refs[2 * layer], param_refs[2 * layer + 1])
            h = jnp.maximum(h, 0.0)                  # ReLU in f32
            if n_masks:
                h = h * mask_refs[layer][...]        # pre-scaled keep mask (f32)
        # output layer: no activation, no dropout
        y = dense(h, param_refs[-2], param_refs[-1])
        out_ref[...] = y.astype(out_ref.dtype)

    return kernel


@functools.partial(
    jax.jit,
    static_argnames=("n_hiddens", "dropout", "training", "tb", "compute_dtype"))
def mlp_pallas(x, params, dropout_key=None, *, n_hiddens, dropout,
               training=False, tb=128, compute_dtype=jnp.bfloat16):
    """Forward pass of the MLP.

    params: flat tuple (w_in, b_in, w_h0, b_h0, ..., w_out, b_out) with weights
            stored [fan_in, fan_out] (transposed vs. nn.Linear) and 1-D biases.
    x:      [B, size_input] float32.  Returns [B, size_output] float32.
    """
    assert len(params) == 2 * (n_hiddens + 2)
    B, d_in = x.shape
    d_out = params[-2].shape[1]

    # ---- pad batch to the tile and all feature dims to lane width (128) ----
    b_pad = _round_up(B, tb)
    x_p = _pad2(x, b_pad, _round_up(d_in, 128)).astype(compute_dtype)

    padded_params = []
    for w, b in zip(params[::2], params[1::2]):
        k, n = w.shape
        k_p, n_p = _round_up(k, 128), _round_up(n, 128)
        padded_params.append(_pad2(w, k_p, n_p).astype(compute_dtype))
        padded_params.append(_pad2(b.reshape(1, -1), 1, n_p).astype(jnp.float32))

    d_in_p = x_p.shape[1]
    h_p = padded_params[0].shape[1]        # padded hidden width
    d_out_p = padded_params[-1].shape[1]   # padded output width

    # ---- dropout keep masks (training mode only) ----------------------------
    n_masks = (n_hiddens + 1) if (training and dropout > 0.0) else 0
    masks = (_dropout_masks(dropout_key, n_masks, (b_pad, h_p), dropout)
             if n_masks else [])

    # ---- specs ---------------------------------------------------------------
    x_spec = pl.BlockSpec((tb, d_in_p), lambda i: (i, 0))
    mask_specs = [pl.BlockSpec((tb, h_p), lambda i: (i, 0)) for _ in range(n_masks)]
    # Parameters: whole-array, resident in VMEM, single-buffered (their block
    # never changes across the batch grid -> no double buffering needed).
    param_specs = [pl.BlockSpec(memory_space=pltpu.MemorySpace.VMEM)
                   for _ in padded_params]
    out_spec = pl.BlockSpec((tb, d_out_p), lambda i: (i, 0))

    # ---- VMEM budget & cost estimate -----------------------------------------
    itemsize = jnp.dtype(compute_dtype).itemsize
    param_bytes = sum(int(p.size) * p.dtype.itemsize for p in padded_params)
    stream_bytes = 2 * tb * (d_in_p * itemsize + d_out_p * 4 + n_masks * h_p * 4)
    live_act_bytes = 4 * tb * max(h_p, d_out_p) * 4
    needed = param_bytes + stream_bytes + live_act_bytes
    vmem_limit = int(min(max(2 * needed, 32 << 20), 64 << 20))  # v7x-safe cap

    flops = 2 * b_pad * sum(int(w.shape[0]) * int(w.shape[1])
                            for w in padded_params[::2])
    bytes_accessed = (param_bytes + int(x_p.size) * itemsize
                      + b_pad * d_out_p * 4 + n_masks * b_pad * h_p * 4)
    cost = pl.CostEstimate(flops=flops, transcendentals=0,
                           bytes_accessed=bytes_accessed)

    kernel = _make_mlp_kernel(n_hiddens, n_masks, compute_dtype)

    out_p = pl.pallas_call(
        kernel,
        out_shape=jax.ShapeDtypeStruct((b_pad, d_out_p), jnp.float32),
        grid=(b_pad // tb,),
        in_specs=[x_spec] + mask_specs + param_specs,
        out_specs=out_spec,
        compiler_params=pltpu.CompilerParams(
            dimension_semantics=("parallel",),
            vmem_limit_bytes=vmem_limit),
        cost_estimate=cost,
    )(x_p, *masks, *padded_params)

    return out_p[:B, :d_out]


def init_mlp_params(key, size_input, size_hidden, size_output, n_hiddens):
    """nn.Linear-style init: uniform(+/- 1/sqrt(fan_in)); weights [fan_in, fan_out]."""
    dims = [(size_input, size_hidden)]
    dims += [(size_hidden, size_hidden)] * n_hiddens
    dims += [(size_hidden, size_output)]
    params = []
    for fan_in, fan_out in dims:
        key, kw, kb = jax.random.split(key, 3)
        bound = 1.0 / (fan_in ** 0.5)
        params.append(jax.random.uniform(kw, (fan_in, fan_out), jnp.float32,
                                         -bound, bound))
        params.append(jax.random.uniform(kb, (fan_out,), jnp.float32,
                                         -bound, bound))
    return tuple(params)


def mlp_reference(x, params, n_hiddens, masks=None, compute_dtype=jnp.bfloat16):
    """Pure-JAX reference with the same dtype policy (bf16 operands, f32 acc)."""
    def dense(h, w, b):
        return jnp.dot(h.astype(compute_dtype), w.astype(compute_dtype),
                       preferred_element_type=jnp.float32) + b.reshape(1, -1)
    h = x
    for layer in range(n_hiddens + 1):
        h = jnp.maximum(dense(h, params[2 * layer], params[2 * layer + 1]), 0.0)
        if masks is not None:
            h = h * masks[layer]
    return dense(h, params[-2], params[-1])


if __name__ == "__main__":
    # Small, module-consistent shapes.
    B = 16
    size_input, size_hidden, size_output = 32, 64, 16
    n_hiddens = 2
    dropout = 0.1
    tb = 128  # batch tile (>=128 per perf review; batch is padded up to it)

    key = jax.random.PRNGKey(0)
    key, kx, kd = jax.random.split(key, 3)
    x = jax.random.normal(kx, (B, size_input), jnp.float32)
    params = init_mlp_params(key, size_input, size_hidden, size_output, n_hiddens)

    # ---- eval mode: dropout is the identity --------------------------------
    y = mlp_pallas(x, params, None, n_hiddens=n_hiddens, dropout=dropout,
                   training=False, tb=tb)
    jax.block_until_ready(y)
    y_ref = mlp_reference(x, params, n_hiddens)
    assert y.shape == (B, size_output)
    assert jnp.allclose(y, y_ref, atol=1e-2, rtol=1e-2), "eval mismatch vs reference"

    # ---- training mode: same Bernoulli keep masks replicated in the reference
    y_tr = mlp_pallas(x, params, kd, n_hiddens=n_hiddens, dropout=dropout,
                      training=True, tb=tb)
    jax.block_until_ready(y_tr)
    b_pad = _round_up(B, tb)
    h_pad = _round_up(size_hidden, 128)
    masks_full = _dropout_masks(kd, n_hiddens + 1, (b_pad, h_pad), dropout)
    masks_ref = [m[:B, :size_hidden] for m in masks_full]
    y_tr_ref = mlp_reference(x, params, n_hiddens, masks=masks_ref)
    assert y_tr.shape == (B, size_output)
    assert jnp.allclose(y_tr, y_tr_ref, atol=1e-2, rtol=1e-2), "train mismatch vs reference"

    print("KERNEL_OK")
</pallas_src>

<mosaic_0001>
module attributes {stable_mosaic.version = 11 : i64} {
  func.func @kernel(%arg0: i32, %arg1: memref<128x128xbf16, #tpu.memory_space<vmem>>, %arg2: memref<128x128xbf16, #tpu.memory_space<vmem>>, %arg3: memref<1x128xf32, #tpu.memory_space<vmem>>, %arg4: memref<128x128xbf16, #tpu.memory_space<vmem>>, %arg5: memref<1x128xf32, #tpu.memory_space<vmem>>, %arg6: memref<128x128xbf16, #tpu.memory_space<vmem>>, %arg7: memref<1x128xf32, #tpu.memory_space<vmem>>, %arg8: memref<128x128xbf16, #tpu.memory_space<vmem>>, %arg9: memref<1x128xf32, #tpu.memory_space<vmem>>, %arg10: memref<128x128xf32, #tpu.memory_space<vmem>>) attributes {dimension_semantics = [#tpu.dimension_semantics<parallel>], iteration_bounds = array<i64: 1>, scalar_prefetch = 0 : i64, scratch_operands = 0 : i64, tpu.core_type = #tpu.core_type<tc>, window_params = [{transform_indices = @transform_0, window_bounds = array<i64: 128, 128>}, {pipeline_mode = #tpu.pipeline_mode<synchronous>, transform_indices = @transform_1, window_bounds = array<i64: 128, 128>}, {pipeline_mode = #tpu.pipeline_mode<synchronous>, transform_indices = @transform_2, window_bounds = array<i64: 1, 128>}, {pipeline_mode = #tpu.pipeline_mode<synchronous>, transform_indices = @transform_3, window_bounds = array<i64: 128, 128>}, {pipeline_mode = #tpu.pipeline_mode<synchronous>, transform_indices = @transform_4, window_bounds = array<i64: 1, 128>}, {pipeline_mode = #tpu.pipeline_mode<synchronous>, transform_indices = @transform_5, window_bounds = array<i64: 128, 128>}, {pipeline_mode = #tpu.pipeline_mode<synchronous>, transform_indices = @transform_6, window_bounds = array<i64: 1, 128>}, {pipeline_mode = #tpu.pipeline_mode<synchronous>, transform_indices = @transform_7, window_bounds = array<i64: 128, 128>}, {pipeline_mode = #tpu.pipeline_mode<synchronous>, transform_indices = @transform_8, window_bounds = array<i64: 1, 128>}, {transform_indices = @transform_9, window_bounds = array<i64: 128, 128>}]} {
    %c0 = arith.constant 0 : index
    %c0_0 = arith.constant 0 : index
    %0 = vector.load %arg1[%c0, %c0_0] : memref<128x128xbf16, #tpu.memory_space<vmem>>, vector<128x128xbf16>
    %c0_1 = arith.constant 0 : index
    %c0_2 = arith.constant 0 : index
    %1 = vector.load %arg2[%c0_1, %c0_2] : memref<128x128xbf16, #tpu.memory_space<vmem>>, vector<128x128xbf16>
    %cst = arith.constant dense<0.000000e+00> : vector<128x128xf32>
    %2 = tpu.matmul %0, %1, %cst {dimension_numbers = #tpu.dot_dimension_numbers<[1], [0], [0], [1], [0, 0, 1, 1], [], []>} : vector<128x128xbf16>, vector<128x128xbf16>, vector<128x128xf32> -> vector<128x128xf32>
    %c0_3 = arith.constant 0 : index
    %c0_4 = arith.constant 0 : index
    %3 = vector.load %arg3[%c0_3, %c0_4] : memref<1x128xf32, #tpu.memory_space<vmem>>, vector<1x128xf32>
    %4 = vector.broadcast %3 : vector<1x128xf32> to vector<128x128xf32>
    %5 = arith.addf %2, %4 : vector<128x128xf32>
    %cst_5 = arith.constant 0.000000e+00 : f32
    %6 = vector.broadcast %cst_5 : f32 to vector<128x128xf32>
    %7 = arith.maximumf %5, %6 : vector<128x128xf32>
    %8 = arith.truncf %7 : vector<128x128xf32> to vector<128x128xbf16>
    %c0_6 = arith.constant 0 : index
    %c0_7 = arith.constant 0 : index
    %9 = vector.load %arg4[%c0_6, %c0_7] : memref<128x128xbf16, #tpu.memory_space<vmem>>, vector<128x128xbf16>
    %cst_8 = arith.constant dense<0.000000e+00> : vector<128x128xf32>
    %10 = tpu.matmul %8, %9, %cst_8 {dimension_numbers = #tpu.dot_dimension_numbers<[1], [0], [0], [1], [0, 0, 1, 1], [], []>} : vector<128x128xbf16>, vector<128x128xbf16>, vector<128x128xf32> -> vector<128x128xf32>
    %c0_9 = arith.constant 0 : index
    %c0_10 = arith.constant 0 : index
    %11 = vector.load %arg5[%c0_9, %c0_10] : memref<1x128xf32, #tpu.memory_space<vmem>>, vector<1x128xf32>
    %12 = vector.broadcast %11 : vector<1x128xf32> to vector<128x128xf32>
    %13 = arith.addf %10, %12 : vector<128x128xf32>
    %cst_11 = arith.constant 0.000000e+00 : f32
    %14 = vector.broadcast %cst_11 : f32 to vector<128x128xf32>
    %15 = arith.maximumf %13, %14 : vector<128x128xf32>
    %16 = arith.truncf %15 : vector<128x128xf32> to vector<128x128xbf16>
    %c0_12 = arith.constant 0 : index
    %c0_13 = arith.constant 0 : index
    %17 = vector.load %arg6[%c0_12, %c0_13] : memref<128x128xbf16, #tpu.memory_space<vmem>>, vector<128x128xbf16>
    %cst_14 = arith.constant dense<0.000000e+00> : vector<128x128xf32>
    %18 = tpu.matmul %16, %17, %cst_14 {dimension_numbers = #tpu.dot_dimension_numbers<[1], [0], [0], [1], [0, 0, 1, 1], [], []>} : vector<128x128xbf16>, vector<128x128xbf16>, vector<128x128xf32> -> vector<128x128xf32>
    %c0_15 = arith.constant 0 : index
    %c0_16 = arith.constant 0 : index
    %19 = vector.load %arg7[%c0_15, %c0_16] : memref<1x128xf32, #tpu.memory_space<vmem>>, vector<1x128xf32>
    %20 = vector.broadcast %19 : vector<1x128xf32> to vector<128x128xf32>
    %21 = arith.addf %18, %20 : vector<128x128xf32>
    %cst_17 = arith.constant 0.000000e+00 : f32
    %22 = vector.broadcast %cst_17 : f32 to vector<128x128xf32>
    %23 = arith.maximumf %21, %22 : vector<128x128xf32>
    %24 = arith.truncf %23 : vector<128x128xf32> to vector<128x128xbf16>
    %c0_18 = arith.constant 0 : index
    %c0_19 = arith.constant 0 : index
    %25 = vector.load %arg8[%c0_18, %c0_19] : memref<128x128xbf16, #tpu.memory_space<vmem>>, vector<128x128xbf16>
    %cst_20 = arith.constant dense<0.000000e+00> : vector<128x128xf32>
    %26 = tpu.matmul %24, %25, %cst_20 {dimension_numbers = #tpu.dot_dimension_numbers<[1], [0], [0], [1], [0, 0, 1, 1], [], []>} : vector<128x128xbf16>, vector<128x128xbf16>, vector<128x128xf32> -> vector<128x128xf32>
    %c0_21 = arith.constant 0 : index
    %c0_22 = arith.constant 0 : index
    %27 = vector.load %arg9[%c0_21, %c0_22] : memref<1x128xf32, #tpu.memory_space<vmem>>, vector<1x128xf32>
    %28 = vector.broadcast %27 : vector<1x128xf32> to vector<128x128xf32>
    %29 = arith.addf %26, %28 : vector<128x128xf32>
    %c0_23 = arith.constant 0 : index
    %c0_24 = arith.constant 0 : index
    %30 = vector.load %arg10[%c0_23, %c0_24] : memref<128x128xf32, #tpu.memory_space<vmem>>, vector<128x128xf32>
    tpu.vector_store %arg10[%c0_23, %c0_24], %29 {strides = array<i32>} : memref<128x128xf32, #tpu.memory_space<vmem>>, vector<128x128xf32>,
    return
  }
  func.func @transform_0(%arg0: i32) -> (i32, i32) {
    %c0_i32 = arith.constant 0 : i32
    %c0_i32_0 = arith.constant 0 : i32
    return %arg0, %c0_i32 : i32, i32
  }
  func.func @transform_1(%arg0: i32) -> (i32, i32) {
    %c0_i32 = arith.constant 0 : i32
    %c0_i32_0 = arith.constant 0 : i32
    %c0_i32_1 = arith.constant 0 : i32
    return %c0_i32, %c0_i32_0 : i32, i32
  }
  func.func @transform_2(%arg0: i32) -> (i32, i32) {
    %c0_i32 = arith.constant 0 : i32
    %c0_i32_0 = arith.constant 0 : i32
    %c0_i32_1 = arith.constant 0 : i32
    return %c0_i32, %c0_i32_0 : i32, i32
  }
  func.func @transform_3(%arg0: i32) -> (i32, i32) {
    %c0_i32 = arith.constant 0 : i32
    %c0_i32_0 = arith.constant 0 : i32
    %c0_i32_1 = arith.constant 0 : i32
    return %c0_i32, %c0_i32_0 : i32, i32
  }
  func.func @transform_4(%arg0: i32) -> (i32, i32) {
    %c0_i32 = arith.constant 0 : i32
    %c0_i32_0 = arith.constant 0 : i32
    %c0_i32_1 = arith.constant 0 : i32
    return %c0_i32, %c0_i32_0 : i32, i32
  }
  func.func @transform_5(%arg0: i32) -> (i32, i32) {
    %c0_i32 = arith.constant 0 : i32
    %c0_i32_0 = arith.constant 0 : i32
    %c0_i32_1 = arith.constant 0 : i32
    return %c0_i32, %c0_i32_0 : i32, i32
  }
  func.func @transform_6(%arg0: i32) -> (i32, i32) {
    %c0_i32 = arith.constant 0 : i32
    %c0_i32_0 = arith.constant 0 : i32
    %c0_i32_1 = arith.constant 0 : i32
    return %c0_i32, %c0_i32_0 : i32, i32
  }
  func.func @transform_7(%arg0: i32) -> (i32, i32) {
    %c0_i32 = arith.constant 0 : i32
    %c0_i32_0 = arith.constant 0 : i32
    %c0_i32_1 = arith.constant 0 : i32
    return %c0_i32, %c0_i32_0 : i32, i32
  }
  func.func @transform_8(%arg0: i32) -> (i32, i32) {
    %c0_i32 = arith.constant 0 : i32
    %c0_i32_0 = arith.constant 0 : i32
    %c0_i32_1 = arith.constant 0 : i32
    return %c0_i32, %c0_i32_0 : i32, i32
  }
  func.func @transform_9(%arg0: i32) -> (i32, i32) {
    %c0_i32 = arith.constant 0 : i32
    %c0_i32_0 = arith.constant 0 : i32
    return %arg0, %c0_i32 : i32, i32
  }
}

</mosaic_0001>

<llo_original>
// kernel: mlp_pallas.1
$region0: #{mlp_pallas.1}
  #allocation0 [shape = 'u32[]', space=smem, size = 0x4, offset = 0x4, fixed_abs, tag = 'smem constant byte address 0x4 - core index']
  #allocation1 [shape = 'u32[144,128]{1,0:T(1,128)}', space=vmem, size = 0x12000, scoped, tag = 'internal scratch']
  %s0 = inlined_call_operand.vmem [shape: bf16[128,128], index: 0, kind: input, shape index: {}]
  %s1 = inlined_call_operand.vmem [shape: bf16[128,128], index: 1, kind: input, shape index: {}]
  %s2 = inlined_call_operand.vmem [shape: f32[1,128], index: 2, kind: input, shape index: {}]
  %s3 = inlined_call_operand.vmem [shape: bf16[128,128], index: 3, kind: input, shape index: {}]
  %s4 = inlined_call_operand.vmem [shape: f32[1,128], index: 4, kind: input, shape index: {}]
  %s5 = inlined_call_operand.vmem [shape: bf16[128,128], index: 5, kind: input, shape index: {}]
  %s6 = inlined_call_operand.vmem [shape: f32[1,128], index: 6, kind: input, shape index: {}]
  %s7 = inlined_call_operand.vmem [shape: bf16[128,128], index: 7, kind: input, shape index: {}]
  %s8 = inlined_call_operand.vmem [shape: f32[1,128], index: 8, kind: input, shape index: {}]
  %s9 = inlined_call_operand.vmem [shape: f32[128,128], index: 9, kind: output, shape index: {}]
  %s10 = sld [smem:[#allocation0]]
  $region46: #{mlp_pallas.1} parent=0
    _
  %s12 = ssub.s32 1, %s10
  %s13 = scalar_select 0, %s12, %s10
  // Predicated region
  $region2: #{mlp_pallas.1} parent=0 // pred_check
    _
  $region3: #{mlp_pallas.1} parent=0 // pred_check_branch
    %15 = sbr.rel (0) target = $region5
  $region4: #{mlp_pallas.1} parent=0 // pred_region
    _
  $region5: #{mlp_pallas.1} parent=0 // pred_fallthru
    _
  // Predicated region
  $region6: #{mlp_pallas.1} parent=0 // pred_check
    _
  $region7: #{mlp_pallas.1} parent=0 // pred_check_branch
    %17 = sbr.rel (0) target = $region9
  $region8: #{mlp_pallas.1} parent=0 // pred_region
    _
  $region9: #{mlp_pallas.1} parent=0 // pred_fallthru
    _
  // Predicated region
  $region10: #{mlp_pallas.1} parent=0 // pred_check
    _
  $region11: #{mlp_pallas.1} parent=0 // pred_check_branch
    %19 = sbr.rel (0) target = $region13
  $region12: #{mlp_pallas.1} parent=0 // pred_region
    _
  $region13: #{mlp_pallas.1} parent=0 // pred_fallthru
    _
  // Predicated region
  $region14: #{mlp_pallas.1} parent=0 // pred_check
    _
  $region15: #{mlp_pallas.1} parent=0 // pred_check_branch
    %21 = sbr.rel (0) target = $region17
  $region16: #{mlp_pallas.1} parent=0 // pred_region
    _
  $region17: #{mlp_pallas.1} parent=0 // pred_fallthru
    _
  // Predicated region
  $region18: #{mlp_pallas.1} parent=0 // pred_check
    _
  $region19: #{mlp_pallas.1} parent=0 // pred_check_branch
    %23 = sbr.rel (0) target = $region21
  $region20: #{mlp_pallas.1} parent=0 // pred_region
    _
  $region21: #{mlp_pallas.1} parent=0 // pred_fallthru
    _
  // Predicated region
  $region22: #{mlp_pallas.1} parent=0 // pred_check
    _
  $region23: #{mlp_pallas.1} parent=0 // pred_check_branch
    %25 = sbr.rel (0) target = $region25
  $region24: #{mlp_pallas.1} parent=0 // pred_region
    _
  $region25: #{mlp_pallas.1} parent=0 // pred_fallthru
    _
  // Predicated region
  $region26: #{mlp_pallas.1} parent=0 // pred_check
    _
  $region27: #{mlp_pallas.1} parent=0 // pred_check_branch
    %27 = sbr.rel (0) target = $region29
  $region28: #{mlp_pallas.1} parent=0 // pred_region
    _
  $region29: #{mlp_pallas.1} parent=0 // pred_fallthru
    _
  // Predicated region
  $region30: #{mlp_pallas.1} parent=0 // pred_check
    _
  $region31: #{mlp_pallas.1} parent=0 // pred_check_branch
    %29 = sbr.rel (0) target = $region33
  $region32: #{mlp_pallas.1} parent=0 // pred_region
    _
  $region33: #{mlp_pallas.1} parent=0 // pred_fallthru
    _
  // Predicated region
  $region34: #{mlp_pallas.1} parent=0 // pred_check
    _
  $region35: #{mlp_pallas.1} parent=0 // pred_check_branch
    %31 = sbr.rel (0) target = $region37
  $region36: #{mlp_pallas.1} parent=0 // pred_region
    _
  $region37: #{mlp_pallas.1} parent=0 // pred_fallthru
    _
  %v33 = vld [vmem:[%s0] sm:$0xf]
  %v34 = vld [vmem:[%s0 + $0x4] sm:$0xf]
  %v35 = vld [vmem:[%s0 + $0x8] sm:$0xf]
  %v36 = vld [vmem:[%s0 + $0xc] sm:$0xf]
  %v37 = vld [vmem:[%s0 + $0x10] sm:$0xf]
  %v38 = vld [vmem:[%s0 + $0x14] sm:$0xf]
  %v39 = vld [vmem:[%s0 + $0x18] sm:$0xf]
  %v40 = vld [vmem:[%s0 + $0x1c] sm:$0xf]
  %v41 = vld [vmem:[%s0 + $0x20] sm:$0xf]
  %v42 = vld [vmem:[%s0 + $0x24] sm:$0xf]
  %v43 = vld [vmem:[%s0 + $0x28] sm:$0xf]
  %v44 = vld [vmem:[%s0 + $0x2c] sm:$0xf]
  %v45 = vld [vmem:[%s0 + $0x30] sm:$0xf]
  %v46 = vld [vmem:[%s0 + $0x34] sm:$0xf]
  %v47 = vld [vmem:[%s0 + $0x38] sm:$0xf]
  %v48 = vld [vmem:[%s0 + $0x3c] sm:$0xf]
  %v49 = vld [vmem:[%s1] sm:$0xf]
  %v50 = vld [vmem:[%s1 + $0x4] sm:$0xf]
  %v51 = vld [vmem:[%s1 + $0x8] sm:$0xf]
  %v52 = vld [vmem:[%s1 + $0xc] sm:$0xf]
  %v53 = vld [vmem:[%s1 + $0x10] sm:$0xf]
  %v54 = vld [vmem:[%s1 + $0x14] sm:$0xf]
  %v55 = vld [vmem:[%s1 + $0x18] sm:$0xf]
  %v56 = vld [vmem:[%s1 + $0x1c] sm:$0xf]
  %v57 = vld [vmem:[%s1 + $0x20] sm:$0xf]
  %v58 = vld [vmem:[%s1 + $0x24] sm:$0xf]
  %v59 = vld [vmem:[%s1 + $0x28] sm:$0xf]
  %v60 = vld [vmem:[%s1 + $0x2c] sm:$0xf]
  %v61 = vld [vmem:[%s1 + $0x30] sm:$0xf]
  %v62 = vld [vmem:[%s1 + $0x34] sm:$0xf]
  %v63 = vld [vmem:[%s1 + $0x38] sm:$0xf]
  %v64 = vld [vmem:[%s1 + $0x3c] sm:$0xf]
  %v65 = vld [vmem:[%s2] sm:$0x1]
  %v67 = vlaneseq
  %v68 = vshrl.u32 %v67, 7
  %v69 = vsub.s32 0, %v68
  %v70 = vrot.slane %v65, %v69
  %v88 = vunpack.c.l.b16 %v33
  %v89 = vunpack.c.l.b16 %v34
  %v90 = vunpack.c.l.b16 %v35
  %v91 = vunpack.c.l.b16 %v36
  %v92 = vunpack.c.l.b16 %v37
  %v93 = vunpack.c.l.b16 %v38
  %v94 = vunpack.c.l.b16 %v39
  %v95 = vunpack.c.l.b16 %v40
  %v96 = vunpack.c.l.b16 %v41
  %v97 = vunpack.c.l.b16 %v42
  %v98 = vunpack.c.l.b16 %v43
  %v99 = vunpack.c.l.b16 %v44
  %v100 = vunpack.c.l.b16 %v45
  %v101 = vunpack.c.l.b16 %v46
  %v102 = vunpack.c.l.b16 %v47
  %v103 = vunpack.c.l.b16 %v48
  %v104 = vpack.c.b16 %v89, %v88
  %v105 = vpack.c.b16 %v91, %v90
  %v106 = vpack.c.b16 %v93, %v92
  %v107 = vpack.c.b16 %v95, %v94
  %v108 = vpack.c.b16 %v97, %v96
  %v109 = vpack.c.b16 %v99, %v98
  %v110 = vpack.c.b16 %v101, %v100
  %v111 = vpack.c.b16 %v103, %v102
  %v136 = vunpack.c.l.b16 %v49
  %v137 = vunpack.c.l.b16 %v50
  %v138 = vunpack.c.l.b16 %v51
  %v139 = vunpack.c.l.b16 %v52
  %v140 = vunpack.c.l.b16 %v53
  %v141 = vunpack.c.l.b16 %v54
  %v142 = vunpack.c.l.b16 %v55
  %v143 = vunpack.c.l.b16 %v56
  %v144 = vunpack.c.l.b16 %v57
  %v145 = vunpack.c.l.b16 %v58
  %v146 = vunpack.c.l.b16 %v59
  %v147 = vunpack.c.l.b16 %v60
  %v148 = vunpack.c.l.b16 %v61
  %v149 = vunpack.c.l.b16 %v62
  %v150 = vunpack.c.l.b16 %v63
  %v151 = vunpack.c.l.b16 %v64
  %v152 = vpack.c.b16 %v137, %v136
  %v153 = vpack.c.b16 %v139, %v138
  %v154 = vpack.c.b16 %v141, %v140
  %v155 = vpack.c.b16 %v143, %v142
  %v156 = vpack.c.b16 %v145, %v144
  %v157 = vpack.c.b16 %v147, %v146
  %v158 = vpack.c.b16 %v149, %v148
  %v159 = vpack.c.b16 %v151, %v150
  %168 = vmatprep.subr.bf16.mxu0 0
  %169 = vmatpush1.bf16.msra.mxu0 %v152
  %170 = vmatprep.subr.bf16.mxu0 0
  %171 = vmatpush1.bf16.msra.mxu0 %v153
  %172 = vmatprep.subr.bf16.mxu0 0
  %173 = vmatpush1.bf16.msra.mxu0 %v154
  %174 = vmatprep.subr.bf16.mxu0 0
  %175 = vmatpush1.bf16.msra.mxu0 %v155
  %176 = vmatprep.subr.bf16.mxu0 0
  %177 = vmatpush1.bf16.msra.mxu0 %v156
  %178 = vmatprep.subr.bf16.mxu0 0
  %179 = vmatpush1.bf16.msra.mxu0 %v157
  %180 = vmatprep.subr.bf16.mxu0 0
  %181 = vmatpush1.bf16.msra.mxu0 %v158
  %182 = vmatprep.subr.bf16.mxu0 0
  %183 = vmatpush1.bf16.msra.mxu0 %v159
  %184 = vmatprep.subr.bf16.mxu0 0
  %185 = vmatpush1.bf16.msra.mxu0 0
  %186 = vmatprep.subr.bf16.mxu0 0
  %187 = vmatpush1.bf16.msra.mxu0 0
  %188 = vmatprep.subr.bf16.mxu0 0
  %189 = vmatpush1.bf16.msra.mxu0 0
  %190 = vmatprep.subr.bf16.mxu0 0
  %191 = vmatpush1.bf16.msra.mxu0 0
  %192 = vmatprep.subr.bf16.mxu0 0
  %193 = vmatpush1.bf16.msra.mxu0 0
  %194 = vmatprep.subr.bf16.mxu0 0
  %195 = vmatpush1.bf16.msra.mxu0 0
  %196 = vmatprep.subr.bf16.mxu0 0
  %197 = vmatpush1.bf16.msra.mxu0 0
  %198 = vmatprep.subr.bf16.mxu0 0
  %199 = vmatpush1.bf16.msra.mxu0 0
  %200 = vmatprep.mubr.bf16.mxu0 0
  %201 = vmatmul.mubr.bf16.gmra.mrb[0].mxu0 %v104
  %v202 = vpop.f32.mrb[0].mxu0
  %v203 = vadd.f32 %v70, %v202
  %v204 = vpop.f32.mrb[0].mxu0
  %v205 = vpop.f32.mrb[0].mxu0
  %v206 = vadd.f32 %v70, %v205
  %v207 = vpop.f32.mrb[0].mxu0
  %208 = vmatprep.mubr.bf16.mxu0 0
  %209 = vmatmul.mubr.bf16.gmra.mrb[0].mxu0 %v105
  %v210 = vpop.f32.mrb[0].mxu0
  %v211 = vadd.f32 %v70, %v210
  %v212 = vpop.f32.mrb[0].mxu0
  %v213 = vpop.f32.mrb[0].mxu0
  %v214 = vadd.f32 %v70, %v213
  %v215 = vpop.f32.mrb[0].mxu0
  %216 = vmatprep.mubr.bf16.mxu0 0
  %217 = vmatmul.mubr.bf16.gmra.mrb[0].mxu0 %v106
  %v218 = vpop.f32.mrb[0].mxu0
  %v219 = vadd.f32 %v70, %v218
  %v220 = vpop.f32.mrb[0].mxu0
  %v221 = vpop.f32.mrb[0].mxu0
  %v222 = vadd.f32 %v70, %v221
  %v223 = vpop.f32.mrb[0].mxu0
  %224 = vmatprep.mubr.bf16.mxu0 0
  %225 = vmatmul.mubr.bf16.gmra.mrb[0].mxu0 %v107
  %v226 = vpop.f32.mrb[0].mxu0
  %v227 = vadd.f32 %v70, %v226
  %v228 = vpop.f32.mrb[0].mxu0
  %v229 = vpop.f32.mrb[0].mxu0
  %v230 = vadd.f32 %v70, %v229
  %v231 = vpop.f32.mrb[0].mxu0
  %232 = vmatprep.mubr.bf16.mxu0 0
  %233 = vmatmul.mubr.bf16.gmra.mrb[0].mxu0 %v108
  %v234 = vpop.f32.mrb[0].mxu0
  %v235 = vadd.f32 %v70, %v234
  %v236 = vpop.f32.mrb[0].mxu0
  %v237 = vpop.f32.mrb[0].mxu0
  %v238 = vadd.f32 %v70, %v237
  %v239 = vpop.f32.mrb[0].mxu0
  %240 = vmatprep.mubr.bf16.mxu0 0
  %241 = vmatmul.mubr.bf16.gmra.mrb[0].mxu0 %v109
  %v242 = vpop.f32.mrb[0].mxu0
  %v243 = vadd.f32 %v70, %v242
  %v244 = vpop.f32.mrb[0].mxu0
  %v245 = vpop.f32.mrb[0].mxu0
  %v246 = vadd.f32 %v70, %v245
  %v247 = vpop.f32.mrb[0].mxu0
  %248 = vmatprep.mubr.bf16.mxu0 0
  %249 = vmatmul.mubr.bf16.gmra.mrb[0].mxu0 %v110
  %v250 = vpop.f32.mrb[0].mxu0
  %v251 = vadd.f32 %v70, %v250
  %v252 = vpop.f32.mrb[0].mxu0
  %v253 = vpop.f32.mrb[0].mxu0
  %v254 = vadd.f32 %v70, %v253
  %v255 = vpop.f32.mrb[0].mxu0
  %256 = vmatprep.mubr.bf16.mxu0 0
  %257 = vmatmul.mubr.bf16.gmra.mrb[0].mxu0 %v111
  %v258 = vpop.f32.mrb[0].mxu0
  %v259 = vadd.f32 %v70, %v258
  %v260 = vpop.f32.mrb[0].mxu0
  %v261 = vpop.f32.mrb[0].mxu0
  %v262 = vadd.f32 %v70, %v261
  %v263 = vpop.f32.mrb[0].mxu0
  %264 = vdwg.mxu0
  %v265 = vmax.f32 %v203, 0.0
  %v266 = vmax.f32 %v206, 0.0
  %v267 = vmax.f32 %v211, 0.0
  %v268 = vmax.f32 %v214, 0.0
  %v269 = vmax.f32 %v219, 0.0
  %v270 = vmax.f32 %v222, 0.0
  %v271 = vmax.f32 %v227, 0.0
  %v272 = vmax.f32 %v230, 0.0
  %v273 = vmax.f32 %v235, 0.0
  %v274 = vmax.f32 %v238, 0.0
  %v275 = vmax.f32 %v243, 0.0
  %v276 = vmax.f32 %v246, 0.0
  %v277 = vmax.f32 %v251, 0.0
  %v278 = vmax.f32 %v254, 0.0
  %v279 = vmax.f32 %v259, 0.0
  %v280 = vmax.f32 %v262, 0.0
  %v281 = vpack.c.bf16 %v266, %v265
  %v282 = vpack.c.bf16 %v268, %v267
  %v283 = vpack.c.bf16 %v270, %v269
  %v284 = vpack.c.bf16 %v272, %v271
  %v285 = vpack.c.bf16 %v274, %v273
  %v286 = vpack.c.bf16 %v276, %v275
  %v287 = vpack.c.bf16 %v278, %v277
  %v288 = vpack.c.bf16 %v280, %v279
  %v289 = vld [vmem:[%s3] sm:$0xf]
  %v290 = vld [vmem:[%s3 + $0x4] sm:$0xf]
  %v291 = vld [vmem:[%s3 + $0x8] sm:$0xf]
  %v292 = vld [vmem:[%s3 + $0xc] sm:$0xf]
  %v293 = vld [vmem:[%s3 + $0x10] sm:$0xf]
  %v294 = vld [vmem:[%s3 + $0x14] sm:$0xf]
  %v295 = vld [vmem:[%s3 + $0x18] sm:$0xf]
  %v296 = vld [vmem:[%s3 + $0x1c] sm:$0xf]
  %v297 = vld [vmem:[%s3 + $0x20] sm:$0xf]
  %v298 = vld [vmem:[%s3 + $0x24] sm:$0xf]
  %v299 = vld [vmem:[%s3 + $0x28] sm:$0xf]
  %v300 = vld [vmem:[%s3 + $0x2c] sm:$0xf]
  %v301 = vld [vmem:[%s3 + $0x30] sm:$0xf]
  %v302 = vld [vmem:[%s3 + $0x34] sm:$0xf]
  %v303 = vld [vmem:[%s3 + $0x38] sm:$0xf]
  %v304 = vld [vmem:[%s3 + $0x3c] sm:$0xf]
  %v305 = vld [vmem:[%s4] sm:$0x1]
  %v307 = vlaneseq
  %v308 = vshrl.u32 %v307, 7
  %v309 = vsub.s32 0, %v308
  %v310 = vrot.slane %v305, %v309
  %v328 = vunpack.c.l.b16 %v289
  %v329 = vunpack.c.l.b16 %v290
  %v330 = vunpack.c.l.b16 %v291
  %v331 = vunpack.c.l.b16 %v292
  %v332 = vunpack.c.l.b16 %v293
  %v333 = vunpack.c.l.b16 %v294
  %v334 = vunpack.c.l.b16 %v295
  %v335 = vunpack.c.l.b16 %v296
  %v336 = vunpack.c.l.b16 %v297
  %v337 = vunpack.c.l.b16 %v298
  %v338 = vunpack.c.l.b16 %v299
  %v339 = vunpack.c.l.b16 %v300
  %v340 = vunpack.c.l.b16 %v301
  %v341 = vunpack.c.l.b16 %v302
  %v342 = vunpack.c.l.b16 %v303
  %v343 = vunpack.c.l.b16 %v304
  %v344 = vpack.c.b16 %v329, %v328
  %v345 = vpack.c.b16 %v331, %v330
  %v346 = vpack.c.b16 %v333, %v332
  %v347 = vpack.c.b16 %v335, %v334
  %v348 = vpack.c.b16 %v337, %v336
  %v349 = vpack.c.b16 %v339, %v338
  %v350 = vpack.c.b16 %v341, %v340
  %v351 = vpack.c.b16 %v343, %v342
  %360 = vmatprep.subr.bf16.mxu0 0
  %361 = vmatpush1.bf16.msra.mxu0 %v344
  %362 = vmatprep.subr.bf16.mxu0 0
  %363 = vmatpush1.bf16.msra.mxu0 %v345
  %364 = vmatprep.subr.bf16.mxu0 0
  %365 = vmatpush1.bf16.msra.mxu0 %v346
  %366 = vmatprep.subr.bf16.mxu0 0
  %367 = vmatpush1.bf16.msra.mxu0 %v347
  %368 = vmatprep.subr.bf16.mxu0 0
  %369 = vmatpush1.bf16.msra.mxu0 %v348
  %370 = vmatprep.subr.bf16.mxu0 0
  %371 = vmatpush1.bf16.msra.mxu0 %v349
  %372 = vmatprep.subr.bf16.mxu0 0
  %373 = vmatpush1.bf16.msra.mxu0 %v350
  %374 = vmatprep.subr.bf16.mxu0 0
  %375 = vmatpush1.bf16.msra.mxu0 %v351
  %376 = vmatprep.subr.bf16.mxu0 0
  %377 = vmatpush1.bf16.msra.mxu0 0
  %378 = vmatprep.subr.bf16.mxu0 0
  %379 = vmatpush1.bf16.msra.mxu0 0
  %380 = vmatprep.subr.bf16.mxu0 0
  %381 = vmatpush1.bf16.msra.mxu0 0
  %382 = vmatprep.subr.bf16.mxu0 0
  %383 = vmatpush1.bf16.msra.mxu0 0
  %384 = vmatprep.subr.bf16.mxu0 0
  %385 = vmatpush1.bf16.msra.mxu0 0
  %386 = vmatprep.subr.bf16.mxu0 0
  %387 = vmatpush1.bf16.msra.mxu0 0
  %388 = vmatprep.subr.bf16.mxu0 0
  %389 = vmatpush1.bf16.msra.mxu0 0
  %390 = vmatprep.subr.bf16.mxu0 0
  %391 = vmatpush1.bf16.msra.mxu0 0
  %392 = vmatprep.mubr.bf16.mxu0 0
  %393 = vmatmul.mubr.bf16.gmra.mrb[0].mxu0 %v281
  %v394 = vpop.f32.mrb[0].mxu0
  %v395 = vadd.f32 %v310, %v394
  %v396 = vpop.f32.mrb[0].mxu0
  %v397 = vpop.f32.mrb[0].mxu0
  %v398 = vadd.f32 %v310, %v397
  %v399 = vpop.f32.mrb[0].mxu0
  %400 = vmatprep.mubr.bf16.mxu0 0
  %401 = vmatmul.mubr.bf16.gmra.mrb[0].mxu0 %v282
  %v402 = vpop.f32.mrb[0].mxu0
  %v403 = vadd.f32 %v310, %v402
  %v404 = vpop.f32.mrb[0].mxu0
  %v405 = vpop.f32.mrb[0].mxu0
  %v406 = vadd.f32 %v310, %v405
  %v407 = vpop.f32.mrb[0].mxu0
  %408 = vmatprep.mubr.bf16.mxu0 0
  %409 = vmatmul.mubr.bf16.gmra.mrb[0].mxu0 %v283
  %v410 = vpop.f32.mrb[0].mxu0
  %v411 = vadd.f32 %v310, %v410
  %v412 = vpop.f32.mrb[0].mxu0
  %v413 = vpop.f32.mrb[0].mxu0
  %v414 = vadd.f32 %v310, %v413
  %v415 = vpop.f32.mrb[0].mxu0
  %416 = vmatprep.mubr.bf16.mxu0 0
  %417 = vmatmul.mubr.bf16.gmra.mrb[0].mxu0 %v284
  %v418 = vpop.f32.mrb[0].mxu0
  %v419 = vadd.f32 %v310, %v418
  %v420 = vpop.f32.mrb[0].mxu0
  %v421 = vpop.f32.mrb[0].mxu0
  %v422 = vadd.f32 %v310, %v421
  %v423 = vpop.f32.mrb[0].mxu0
  %424 = vmatprep.mubr.bf16.mxu0 0
  %425 = vmatmul.mubr.bf16.gmra.mrb[0].mxu0 %v285
  %v426 = vpop.f32.mrb[0].mxu0
  %v427 = vadd.f32 %v310, %v426
  %v428 = vpop.f32.mrb[0].mxu0
  %v429 = vpop.f32.mrb[0].mxu0
  %v430 = vadd.f32 %v310, %v429
  %v431 = vpop.f32.mrb[0].mxu0
  %432 = vmatprep.mubr.bf16.mxu0 0
  %433 = vmatmul.mubr.bf16.gmra.mrb[0].mxu0 %v286
  %v434 = vpop.f32.mrb[0].mxu0
  %v435 = vadd.f32 %v310, %v434
  %v436 = vpop.f32.mrb[0].mxu0
  %v437 = vpop.f32.mrb[0].mxu0
  %v438 = vadd.f32 %v310, %v437
  %v439 = vpop.f32.mrb[0].mxu0
  %440 = vmatprep.mubr.bf16.mxu0 0
  %441 = vmatmul.mubr.bf16.gmra.mrb[0].mxu0 %v287
  %v442 = vpop.f32.mrb[0].mxu0
  %v443 = vadd.f32 %v310, %v442
  %v444 = vpop.f32.mrb[0].mxu0
  %v445 = vpop.f32.mrb[0].mxu0
  %v446 = vadd.f32 %v310, %v445
  %v447 = vpop.f32.mrb[0].mxu0
  %448 = vmatprep.mubr.bf16.mxu0 0
  %449 = vmatmul.mubr.bf16.gmra.mrb[0].mxu0 %v288
  %v450 = vpop.f32.mrb[0].mxu0
  %v451 = vadd.f32 %v310, %v450
  %v452 = vpop.f32.mrb[0].mxu0
  %v453 = vpop.f32.mrb[0].mxu0
  %v454 = vadd.f32 %v310, %v453
  %v455 = vpop.f32.mrb[0].mxu0
  %456 = vdwg.mxu0
  %v457 = vmax.f32 %v395, 0.0
  %v458 = vmax.f32 %v398, 0.0
  %v459 = vmax.f32 %v403, 0.0
  %v460 = vmax.f32 %v406, 0.0
  %v461 = vmax.f32 %v411, 0.0
  %v462 = vmax.f32 %v414, 0.0
  %v463 = vmax.f32 %v419, 0.0
  %v464 = vmax.f32 %v422, 0.0
  %v465 = vmax.f32 %v427, 0.0
  %v466 = vmax.f32 %v430, 0.0
  %v467 = vmax.f32 %v435, 0.0
  %v468 = vmax.f32 %v438, 0.0
  %v469 = vmax.f32 %v443, 0.0
  %v470 = vmax.f32 %v446, 0.0
  %v471 = vmax.f32 %v451, 0.0
  %v472 = vmax.f32 %v454, 0.0
  %v473 = vpack.c.bf16 %v458, %v457
  %v474 = vpack.c.bf16 %v460, %v459
  %v475 = vpack.c.bf16 %v462, %v461
  %v476 = vpack.c.bf16 %v464, %v463
  %v477 = vpack.c.bf16 %v466, %v465
  %v478 = vpack.c.bf16 %v468, %v467
  %v479 = vpack.c.bf16 %v470, %v469
  %v480 = vpack.c.bf16 %v472, %v471
  %v481 = vld [vmem:[%s5] sm:$0xf]
  %v482 = vld [vmem:[%s5 + $0x4] sm:$0xf]
  %v483 = vld [vmem:[%s5 + $0x8] sm:$0xf]
  %v484 = vld [vmem:[%s5 + $0xc] sm:$0xf]
  %v485 = vld [vmem:[%s5 + $0x10] sm:$0xf]
  %v486 = vld [vmem:[%s5 + $0x14] sm:$0xf]
  %v487 = vld [vmem:[%s5 + $0x18] sm:$0xf]
  %v488 = vld [vmem:[%s5 + $0x1c] sm:$0xf]
  %v489 = vld [vmem:[%s5 + $0x20] sm:$0xf]
  %v490 = vld [vmem:[%s5 + $0x24] sm:$0xf]
  %v491 = vld [vmem:[%s5 + $0x28] sm:$0xf]
  %v492 = vld [vmem:[%s5 + $0x2c] sm:$0xf]
  %v493 = vld [vmem:[%s5 + $0x30] sm:$0xf]
  %v494 = vld [vmem:[%s5 + $0x34] sm:$0xf]
  %v495 = vld [vmem:[%s5 + $0x38] sm:$0xf]
  %v496 = vld [vmem:[%s5 + $0x3c] sm:$0xf]
  %v497 = vld [vmem:[%s6] sm:$0x1]
  %v499 = vlaneseq
  %v500 = vshrl.u32 %v499, 7
  %v501 = vsub.s32 0, %v500
  %v502 = vrot.slane %v497, %v501
  %v520 = vunpack.c.l.b16 %v481
  %v521 = vunpack.c.l.b16 %v482
  %v522 = vunpack.c.l.b16 %v483
  %v523 = vunpack.c.l.b16 %v484
  %v524 = vunpack.c.l.b16 %v485
  %v525 = vunpack.c.l.b16 %v486
  %v526 = vunpack.c.l.b16 %v487
  %v527 = vunpack.c.l.b16 %v488
  %v528 = vunpack.c.l.b16 %v489
  %v529 = vunpack.c.l.b16 %v490
  %v530 = vunpack.c.l.b16 %v491
  %v531 = vunpack.c.l.b16 %v492
  %v532 = vunpack.c.l.b16 %v493
  %v533 = vunpack.c.l.b16 %v494
  %v534 = vunpack.c.l.b16 %v495
  %v535 = vunpack.c.l.b16 %v496
  %v536 = vpack.c.b16 %v521, %v520
  %v537 = vpack.c.b16 %v523, %v522
  %v538 = vpack.c.b16 %v525, %v524
  %v539 = vpack.c.b16 %v527, %v526
  %v540 = vpack.c.b16 %v529, %v528
  %v541 = vpack.c.b16 %v531, %v530
  %v542 = vpack.c.b16 %v533, %v532
  %v543 = vpack.c.b16 %v535, %v534
  %552 = vmatprep.subr.bf16.mxu0 0
  %553 = vmatpush1.bf16.msra.mxu0 %v536
  %554 = vmatprep.subr.bf16.mxu0 0
  %555 = vmatpush1.bf16.msra.mxu0 %v537
  %556 = vmatprep.subr.bf16.mxu0 0
  %557 = vmatpush1.bf16.msra.mxu0 %v538
  %558 = vmatprep.subr.bf16.mxu0 0
  %559 = vmatpush1.bf16.msra.mxu0 %v539
  %560 = vmatprep.subr.bf16.mxu0 0
  %561 = vmatpush1.bf16.msra.mxu0 %v540
  %562 = vmatprep.subr.bf16.mxu0 0
  %563 = vmatpush1.bf16.msra.mxu0 %v541
  %564 = vmatprep.subr.bf16.mxu0 0
  %565 = vmatpush1.bf16.msra.mxu0 %v542
  %566 = vmatprep.subr.bf16.mxu0 0
  %567 = vmatpush1.bf16.msra.mxu0 %v543
  %568 = vmatprep.subr.bf16.mxu0 0
  %569 = vmatpush1.bf16.msra.mxu0 0
  %570 = vmatprep.subr.bf16.mxu0 0
  %571 = vmatpush1.bf16.msra.mxu0 0
  %572 = vmatprep.subr.bf16.mxu0 0
  %573 = vmatpush1.bf16.msra.mxu0 0
  %574 = vmatprep.subr.bf16.mxu0 0
  %575 = vmatpush1.bf16.msra.mxu0 0
  %576 = vmatprep.subr.bf16.mxu0 0
  %577 = vmatpush1.bf16.msra.mxu0 0
  %578 = vmatprep.subr.bf16.mxu0 0
  %579 = vmatpush1.bf16.msra.mxu0 0
  %580 = vmatprep.subr.bf16.mxu0 0
  %581 = vmatpush1.bf16.msra.mxu0 0
  %582 = vmatprep.subr.bf16.mxu0 0
  %583 = vmatpush1.bf16.msra.mxu0 0
  %584 = vmatprep.mubr.bf16.mxu0 0
  %585 = vmatmul.mubr.bf16.gmra.mrb[0].mxu0 %v473
  %v586 = vpop.f32.mrb[0].mxu0
  %v587 = vadd.f32 %v502, %v586
  %v588 = vpop.f32.mrb[0].mxu0
  %v589 = vpop.f32.mrb[0].mxu0
  %v590 = vadd.f32 %v502, %v589
  %v591 = vpop.f32.mrb[0].mxu0
  %592 = vmatprep.mubr.bf16.mxu0 0
  %593 = vmatmul.mubr.bf16.gmra.mrb[0].mxu0 %v474
  %v594 = vpop.f32.mrb[0].mxu0
  %v595 = vadd.f32 %v502, %v594
  %v596 = vpop.f32.mrb[0].mxu0
  %v597 = vpop.f32.mrb[0].mxu0
  %v598 = vadd.f32 %v502, %v597
  %v599 = vpop.f32.mrb[0].mxu0
  %600 = vmatprep.mubr.bf16.mxu0 0
  %601 = vmatmul.mubr.bf16.gmra.mrb[0].mxu0 %v475
  %v602 = vpop.f32.mrb[0].mxu0
  %v603 = vadd.f32 %v502, %v602
  %v604 = vpop.f32.mrb[0].mxu0
  %v605 = vpop.f32.mrb[0].mxu0
  %v606 = vadd.f32 %v502, %v605
  %v607 = vpop.f32.mrb[0].mxu0
  %608 = vmatprep.mubr.bf16.mxu0 0
  %609 = vmatmul.mubr.bf16.gmra.mrb[0].mxu0 %v476
  %v610 = vpop.f32.mrb[0].mxu0
  %v611 = vadd.f32 %v502, %v610
  %v612 = vpop.f32.mrb[0].mxu0
  %v613 = vpop.f32.mrb[0].mxu0
  %v614 = vadd.f32 %v502, %v613
  %v615 = vpop.f32.mrb[0].mxu0
  %616 = vmatprep.mubr.bf16.mxu0 0
  %617 = vmatmul.mubr.bf16.gmra.mrb[0].mxu0 %v477
  %v618 = vpop.f32.mrb[0].mxu0
  %v619 = vadd.f32 %v502, %v618
  %v620 = vpop.f32.mrb[0].mxu0
  %v621 = vpop.f32.mrb[0].mxu0
  %v622 = vadd.f32 %v502, %v621
  %v623 = vpop.f32.mrb[0].mxu0
  %624 = vmatprep.mubr.bf16.mxu0 0
  %625 = vmatmul.mubr.bf16.gmra.mrb[0].mxu0 %v478
  %v626 = vpop.f32.mrb[0].mxu0
  %v627 = vadd.f32 %v502, %v626
  %v628 = vpop.f32.mrb[0].mxu0
  %v629 = vpop.f32.mrb[0].mxu0
  %v630 = vadd.f32 %v502, %v629
  %v631 = vpop.f32.mrb[0].mxu0
  %632 = vmatprep.mubr.bf16.mxu0 0
  %633 = vmatmul.mubr.bf16.gmra.mrb[0].mxu0 %v479
  %v634 = vpop.f32.mrb[0].mxu0
  %v635 = vadd.f32 %v502, %v634
  %v636 = vpop.f32.mrb[0].mxu0
  %v637 = vpop.f32.mrb[0].mxu0
  %v638 = vadd.f32 %v502, %v637
  %v639 = vpop.f32.mrb[0].mxu0
  %640 = vmatprep.mubr.bf16.mxu0 0
  %641 = vmatmul.mubr.bf16.gmra.mrb[0].mxu0 %v480
  %v642 = vpop.f32.mrb[0].mxu0
  %v643 = vadd.f32 %v502, %v642
  %v644 = vpop.f32.mrb[0].mxu0
  %v645 = vpop.f32.mrb[0].mxu0
  %v646 = vadd.f32 %v502, %v645
  %v647 = vpop.f32.mrb[0].mxu0
  %648 = vdwg.mxu0
  %v649 = vmax.f32 %v587, 0.0
  %v650 = vmax.f32 %v590, 0.0
  %v651 = vmax.f32 %v595, 0.0
  %v652 = vmax.f32 %v598, 0.0
  %v653 = vmax.f32 %v603, 0.0
  %v654 = vmax.f32 %v606, 0.0
  %v655 = vmax.f32 %v611, 0.0
  %v656 = vmax.f32 %v614, 0.0
  %v657 = vmax.f32 %v619, 0.0
  %v658 = vmax.f32 %v622, 0.0
  %v659 = vmax.f32 %v627, 0.0
  %v660 = vmax.f32 %v630, 0.0
  %v661 = vmax.f32 %v635, 0.0
  %v662 = vmax.f32 %v638, 0.0
  %v663 = vmax.f32 %v643, 0.0
  %v664 = vmax.f32 %v646, 0.0
  %v665 = vpack.c.bf16 %v650, %v649
  %v666 = vpack.c.bf16 %v652, %v651
  %v667 = vpack.c.bf16 %v654, %v653
  %v668 = vpack.c.bf16 %v656, %v655
  %v669 = vpack.c.bf16 %v658, %v657
  %v670 = vpack.c.bf16 %v660, %v659
  %v671 = vpack.c.bf16 %v662, %v661
  %v672 = vpack.c.bf16 %v664, %v663
  %v673 = vld [vmem:[%s7] sm:$0xf]
  %v674 = vld [vmem:[%s7 + $0x4] sm:$0xf]
  %v675 = vld [vmem:[%s7 + $0x8] sm:$0xf]
  %v676 = vld [vmem:[%s7 + $0xc] sm:$0xf]
  %v677 = vld [vmem:[%s7 + $0x10] sm:$0xf]
  %v678 = vld [vmem:[%s7 + $0x14] sm:$0xf]
  %v679 = vld [vmem:[%s7 + $0x18] sm:$0xf]
  %v680 = vld [vmem:[%s7 + $0x1c] sm:$0xf]
  %v681 = vld [vmem:[%s7 + $0x20] sm:$0xf]
  %v682 = vld [vmem:[%s7 + $0x24] sm:$0xf]
  %v683 = vld [vmem:[%s7 + $0x28] sm:$0xf]
  %v684 = vld [vmem:[%s7 + $0x2c] sm:$0xf]
  %v685 = vld [vmem:[%s7 + $0x30] sm:$0xf]
  %v686 = vld [vmem:[%s7 + $0x34] sm:$0xf]
  %v687 = vld [vmem:[%s7 + $0x38] sm:$0xf]
  %v688 = vld [vmem:[%s7 + $0x3c] sm:$0xf]
  %v689 = vld [vmem:[%s8] sm:$0x1]
  %v691 = vlaneseq
  %v692 = vshrl.u32 %v691, 7
  %v693 = vsub.s32 0, %v692
  %v694 = vrot.slane %v689, %v693
  %v712 = vunpack.c.l.b16 %v673
  %v713 = vunpack.c.l.b16 %v674
  %v714 = vunpack.c.l.b16 %v675
  %v715 = vunpack.c.l.b16 %v676
  %v716 = vunpack.c.l.b16 %v677
  %v717 = vunpack.c.l.b16 %v678
  %v718 = vunpack.c.l.b16 %v679
  %v719 = vunpack.c.l.b16 %v680
  %v720 = vunpack.c.l.b16 %v681
  %v721 = vunpack.c.l.b16 %v682
  %v722 = vunpack.c.l.b16 %v683
  %v723 = vunpack.c.l.b16 %v684
  %v724 = vunpack.c.l.b16 %v685
  %v725 = vunpack.c.l.b16 %v686
  %v726 = vunpack.c.l.b16 %v687
  %v727 = vunpack.c.l.b16 %v688
  %v728 = vpack.c.b16 %v713, %v712
  %v729 = vpack.c.b16 %v715, %v714
  %v730 = vpack.c.b16 %v717, %v716
  %v731 = vpack.c.b16 %v719, %v718
  %v732 = vpack.c.b16 %v721, %v720
  %v733 = vpack.c.b16 %v723, %v722
  %v734 = vpack.c.b16 %v725, %v724
  %v735 = vpack.c.b16 %v727, %v726
  %744 = vmatprep.subr.bf16.mxu0 0
  %745 = vmatpush1.bf16.msra.mxu0 %v728
  %746 = vmatprep.subr.bf16.mxu0 0
  %747 = vmatpush1.bf16.msra.mxu0 %v729
  %748 = vmatprep.subr.bf16.mxu0 0
  %749 = vmatpush1.bf16.msra.mxu0 %v730
  %750 = vmatprep.subr.bf16.mxu0 0
  %751 = vmatpush1.bf16.msra.mxu0 %v731
  %752 = vmatprep.subr.bf16.mxu0 0
  %753 = vmatpush1.bf16.msra.mxu0 %v732
  %754 = vmatprep.subr.bf16.mxu0 0
  %755 = vmatpush1.bf16.msra.mxu0 %v733
  %756 = vmatprep.subr.bf16.mxu0 0
  %757 = vmatpush1.bf16.msra.mxu0 %v734
  %758 = vmatprep.subr.bf16.mxu0 0
  %759 = vmatpush1.bf16.msra.mxu0 %v735
  %760 = vmatprep.subr.bf16.mxu0 0
  %761 = vmatpush1.bf16.msra.mxu0 0
  %762 = vmatprep.subr.bf16.mxu0 0
  %763 = vmatpush1.bf16.msra.mxu0 0
  %764 = vmatprep.subr.bf16.mxu0 0
  %765 = vmatpush1.bf16.msra.mxu0 0
  %766 = vmatprep.subr.bf16.mxu0 0
  %767 = vmatpush1.bf16.msra.mxu0 0
  %768 = vmatprep.subr.bf16.mxu0 0
  %769 = vmatpush1.bf16.msra.mxu0 0
  %770 = vmatprep.subr.bf16.mxu0 0
  %771 = vmatpush1.bf16.msra.mxu0 0
  %772 = vmatprep.subr.bf16.mxu0 0
  %773 = vmatpush1.bf16.msra.mxu0 0
  %774 = vmatprep.subr.bf16.mxu0 0
  %775 = vmatpush1.bf16.msra.mxu0 0
  %776 = vmatprep.mubr.bf16.mxu0 0
  %777 = vmatmul.mubr.bf16.gmra.mrb[0].mxu0 %v665
  %v778 = vpop.f32.mrb[0].mxu0
  %v779 = vadd.f32 %v694, %v778
  %v780 = vpop.f32.mrb[0].mxu0
  %v781 = vpop.f32.mrb[0].mxu0
  %v782 = vadd.f32 %v694, %v781
  %v783 = vpop.f32.mrb[0].mxu0
  %784 = vmatprep.mubr.bf16.mxu0 0
  %785 = vmatmul.mubr.bf16.gmra.mrb[0].mxu0 %v666
  %v786 = vpop.f32.mrb[0].mxu0
  %v787 = vadd.f32 %v694, %v786
  %v788 = vpop.f32.mrb[0].mxu0
  %v789 = vpop.f32.mrb[0].mxu0
  %v790 = vadd.f32 %v694, %v789
  %v791 = vpop.f32.mrb[0].mxu0
  %792 = vmatprep.mubr.bf16.mxu0 0
  %793 = vmatmul.mubr.bf16.gmra.mrb[0].mxu0 %v667
  %v794 = vpop.f32.mrb[0].mxu0
  %v795 = vadd.f32 %v694, %v794
  %v796 = vpop.f32.mrb[0].mxu0
  %v797 = vpop.f32.mrb[0].mxu0
  %v798 = vadd.f32 %v694, %v797
  %v799 = vpop.f32.mrb[0].mxu0
  %800 = vmatprep.mubr.bf16.mxu0 0
  %801 = vmatmul.mubr.bf16.gmra.mrb[0].mxu0 %v668
  %v802 = vpop.f32.mrb[0].mxu0
  %v803 = vadd.f32 %v694, %v802
  %v804 = vpop.f32.mrb[0].mxu0
  %v805 = vpop.f32.mrb[0].mxu0
  %v806 = vadd.f32 %v694, %v805
  %v807 = vpop.f32.mrb[0].mxu0
  %808 = vmatprep.mubr.bf16.mxu0 0
  %809 = vmatmul.mubr.bf16.gmra.mrb[0].mxu0 %v669
  %v810 = vpop.f32.mrb[0].mxu0
  %v811 = vadd.f32 %v694, %v810
  %v812 = vpop.f32.mrb[0].mxu0
  %v813 = vpop.f32.mrb[0].mxu0
  %v814 = vadd.f32 %v694, %v813
  %v815 = vpop.f32.mrb[0].mxu0
  %816 = vmatprep.mubr.bf16.mxu0 0
  %817 = vmatmul.mubr.bf16.gmra.mrb[0].mxu0 %v670
  %v818 = vpop.f32.mrb[0].mxu0
  %v819 = vadd.f32 %v694, %v818
  %v820 = vpop.f32.mrb[0].mxu0
  %v821 = vpop.f32.mrb[0].mxu0
  %v822 = vadd.f32 %v694, %v821
  %v823 = vpop.f32.mrb[0].mxu0
  %824 = vmatprep.mubr.bf16.mxu0 0
  %825 = vmatmul.mubr.bf16.gmra.mrb[0].mxu0 %v671
  %v826 = vpop.f32.mrb[0].mxu0
  %v827 = vadd.f32 %v694, %v826
  %v828 = vpop.f32.mrb[0].mxu0
  %v829 = vpop.f32.mrb[0].mxu0
  %v830 = vadd.f32 %v694, %v829
  %v831 = vpop.f32.mrb[0].mxu0
  %832 = vmatprep.mubr.bf16.mxu0 0
  %833 = vmatmul.mubr.bf16.gmra.mrb[0].mxu0 %v672
  %v834 = vpop.f32.mrb[0].mxu0
  %v835 = vadd.f32 %v694, %v834
  %v836 = vpop.f32.mrb[0].mxu0
  %v837 = vpop.f32.mrb[0].mxu0
  %v838 = vadd.f32 %v694, %v837
  %v839 = vpop.f32.mrb[0].mxu0
  %840 = vdwg.mxu0
  %841 = vst [vmem:[%s9] sm:$0xff] %v779
  %842 = vst [vmem:[%s9 + $0x8] sm:$0xff] %v782
  %843 = vst [vmem:[%s9 + $0x10] sm:$0xff] %v787
  %844 = vst [vmem:[%s9 + $0x18] sm:$0xff] %v790
  %845 = vst [vmem:[%s9 + $0x20] sm:$0xff] %v795
  %846 = vst [vmem:[%s9 + $0x28] sm:$0xff] %v798
  %847 = vst [vmem:[%s9 + $0x30] sm:$0xff] %v803
  %848 = vst [vmem:[%s9 + $0x38] sm:$0xff] %v806
  %849 = vst [vmem:[%s9 + $0x40] sm:$0xff] %v811
  %850 = vst [vmem:[%s9 + $0x48] sm:$0xff] %v814
  %851 = vst [vmem:[%s9 + $0x50] sm:$0xff] %v819
  %852 = vst [vmem:[%s9 + $0x58] sm:$0xff] %v822
  %853 = vst [vmem:[%s9 + $0x60] sm:$0xff] %v827
  %854 = vst [vmem:[%s9 + $0x68] sm:$0xff] %v830
  %855 = vst [vmem:[%s9 + $0x70] sm:$0xff] %v835
  %856 = vst [vmem:[%s9 + $0x78] sm:$0xff] %v838
  // Predicated region
  $region38: #{mlp_pallas.1} parent=0 // pred_check
    _
  $region39: #{mlp_pallas.1} parent=0 // pred_check_branch
    %858 = sbr.rel (0) target = $region41
  $region40: #{mlp_pallas.1} parent=0 // pred_region
    _
  $region41: #{mlp_pallas.1} parent=0 // pred_fallthru
    _
  // Predicated region
  $region42: #{mlp_pallas.1} parent=0 // pred_check
    _
  $region43: #{mlp_pallas.1} parent=0 // pred_check_branch
    %860 = sbr.rel (0) target = $region45
  $region44: #{mlp_pallas.1} parent=0 // pred_region
    _
  $region45: #{mlp_pallas.1} parent=0 // pred_fallthru
    _

</llo_original>
